<compile_context>
chip_gen: v6e
topology: v6e:2x2x1
jax: 0.10.0
libtpu: 0.0.40
codegen_flags: <defaults>
</compile_context>

<pallas_src>
import functools

import jax
import jax.numpy as jnp
from jax.experimental import pallas as pl
from jax.experimental.pallas import tpu as pltpu

LANE = 128
SUBLANE = 8


def _round_up(x, m):
    return (x + m - 1) // m * m


def vae_kernel(
    x_ref, eps_ref,
    w1_ref, b1_ref,
    wml_ref, bml_ref,      # fused [mu | logvar] head: (Hp, 2*Lp), (1, 2*Lp)
    w3_ref, b3_ref,
    w4_ref, b4_ref,
    recon_ref, mulogvar_ref,
    *, latent_pad, input_dim,
):
    def mxu(a_f32, w_ref, b_ref):
        # bf16 operands on the MXU, f32 accumulation, f32 bias add.
        return jnp.dot(a_f32.astype(jnp.bfloat16), w_ref[...],
                       preferred_element_type=jnp.float32) + b_ref[...]

    x = x_ref[...]            # (TM, Ip) f32
    eps = eps_ref[...]        # (TM, Lp) f32

    # ---- encode ----
    h1 = jnp.maximum(mxu(x, w1_ref, b1_ref), 0.0)          # ReLU, f32
    ml = mxu(h1, wml_ref, bml_ref)                          # (TM, 2*Lp): [mu | logvar]
    mu = ml[:, :latent_pad]
    logvar = ml[:, latent_pad:]

    # ---- reparameterize (eps sampled in wrapper, see TODO below) ----
    z = mu + eps * jnp.exp(0.5 * logvar)

    # ---- decode ----
    h3 = jnp.maximum(mxu(z, w3_ref, b3_ref), 0.0)           # ReLU, f32
    logits = mxu(h3, w4_ref, b4_ref)                        # (TM, Ip)

    # log_softmax over the TRUE feature width only: padded lanes masked to -inf-ish
    if logits.shape[-1] > input_dim:
        col = jax.lax.broadcasted_iota(jnp.int32, logits.shape, 1)
        logits = jnp.where(col < input_dim, logits, jnp.float32(-1e30))
    m = jnp.max(logits, axis=-1, keepdims=True)
    shifted = logits - m
    lse = jnp.log(jnp.sum(jnp.exp(shifted), axis=-1, keepdims=True))

    recon_ref[...] = shifted - lse        # lane-dense (TM, Ip) store
    mulogvar_ref[...] = ml                # lane-dense (TM, 2*Lp) store


def _prepare_params(params):
    """Pad weights/biases to lane-aligned widths, fuse mu/logvar heads, cast W->bf16."""
    input_dim, hidden_dim = params["w1"].shape
    latent_dim = params["w21"].shape[1]
    Ip, Hp, Lp = (_round_up(d, LANE) for d in (input_dim, hidden_dim, latent_dim))

    def pad_w(w, r, c):
        return jnp.zeros((r, c), jnp.float32).at[: w.shape[0], : w.shape[1]].set(w)

    def pad_b(b, c):
        return jnp.zeros((1, c), jnp.float32).at[:, : b.shape[1]].set(b)

    w1 = pad_w(params["w1"], Ip, Hp).astype(jnp.bfloat16)
    b1 = pad_b(params["b1"], Hp)
    wml = jnp.concatenate(
        [pad_w(params["w21"], Hp, Lp), pad_w(params["w22"], Hp, Lp)], axis=1
    ).astype(jnp.bfloat16)                                   # (Hp, 2*Lp)
    bml = jnp.concatenate([pad_b(params["b21"], Lp), pad_b(params["b22"], Lp)], axis=1)
    w3 = pad_w(params["w3"], Lp, Hp).astype(jnp.bfloat16)
    b3 = pad_b(params["b3"], Hp)
    w4 = pad_w(params["w4"], Hp, Ip).astype(jnp.bfloat16)
    b4 = pad_b(params["b4"], Ip)
    return (w1, b1, wml, bml, w3, b3, w4, b4), (Ip, Hp, Lp)


def vae_forward(x, eps, params):
    """x: (B, input_dim) f32; eps: (B, latent_dim) f32; params: dict of f32 (in,out) weights."""
    B, input_dim = x.shape
    latent_dim = params["w21"].shape[1]

    (w1, b1, wml, bml, w3, b3, w4, b4), (Ip, Hp, Lp) = _prepare_params(params)

    # Batch tile: multiple of 8 sublanes; capped at 256 so double-buffered
    # (TM, Ip) activation tiles stay well inside v7x's 64 MiB VMEM even for
    # MNIST-scale input dims.
    TM = min(256, _round_up(B, SUBLANE))
    B_pad = _round_up(B, TM)

    x_p = jnp.zeros((B_pad, Ip), jnp.float32).at[:B, :input_dim].set(x)
    eps_p = jnp.zeros((B_pad, Lp), jnp.float32).at[:B, :latent_dim].set(eps)

    kernel = functools.partial(vae_kernel, latent_pad=Lp, input_dim=input_dim)

    row = lambda i: (i, 0)      # batch-tiled tensors
    fixed = lambda i: (0, 0)    # VMEM-resident weights / biases

    flops = 2 * B_pad * (Ip * Hp + Hp * 2 * Lp + Lp * Hp + Hp * Ip)
    transcendentals = B_pad * (Lp + Ip + 1)          # exp(std), exp(softmax), log(lse)
    bytes_accessed = (
        x_p.size * 4 + eps_p.size * 4
        + (w1.size + wml.size + w3.size + w4.size) * 2
        + (b1.size + bml.size + b3.size + b4.size) * 4
        + B_pad * Ip * 4 + B_pad * 2 * Lp * 4
    )

    recon_p, mulogvar_p = pl.pallas_call(
        kernel,
        out_shape=(
            jax.ShapeDtypeStruct((B_pad, Ip), jnp.float32),       # log_softmax recon
            jax.ShapeDtypeStruct((B_pad, 2 * Lp), jnp.float32),   # packed [mu | logvar]
        ),
        grid_spec=pltpu.PrefetchScalarGridSpec(
            num_scalar_prefetch=0,
            grid=(B_pad // TM,),
            in_specs=[
                pl.BlockSpec((TM, Ip), row),          # x
                pl.BlockSpec((TM, Lp), row),          # eps
                pl.BlockSpec((Ip, Hp), fixed),        # w1
                pl.BlockSpec((1, Hp), fixed),         # b1
                pl.BlockSpec((Hp, 2 * Lp), fixed),    # fused w21|w22
                pl.BlockSpec((1, 2 * Lp), fixed),     # fused b21|b22
                pl.BlockSpec((Lp, Hp), fixed),        # w3
                pl.BlockSpec((1, Hp), fixed),         # b3
                pl.BlockSpec((Hp, Ip), fixed),        # w4
                pl.BlockSpec((1, Ip), fixed),         # b4
            ],
            out_specs=(
                pl.BlockSpec((TM, Ip), row),
                pl.BlockSpec((TM, 2 * Lp), row),
            ),
        ),
        compiler_params=pltpu.CompilerParams(
            dimension_semantics=("parallel",),
            vmem_limit_bytes=32 * 1024 * 1024,
        ),
        cost_estimate=pl.CostEstimate(
            flops=flops,
            transcendentals=transcendentals,
            bytes_accessed=bytes_accessed,
        ),
    )(x_p, eps_p, w1, b1, wml, bml, w3, b3, w4, b4)

    recon = recon_p[:B, :input_dim]
    mu = mulogvar_p[:B, :latent_dim]
    logvar = mulogvar_p[:B, Lp:Lp + latent_dim]
    return recon, mu, logvar


def init_params(key, input_dim, hidden_dim, latent_dim):
    """Deterministic synthetic init, PyTorch-Linear-style. Weights (in,out); biases (1,out)."""
    def linear(key, fan_in, fan_out):
        kw, kb = jax.random.split(key)
        bound = 1.0 / jnp.sqrt(fan_in)
        w = jax.random.uniform(kw, (fan_in, fan_out), jnp.float32, -bound, bound)
        b = jax.random.uniform(kb, (1, fan_out), jnp.float32, -bound, bound)
        return w, b

    k1, k21, k22, k3, k4 = jax.random.split(key, 5)
    w1, b1 = linear(k1, input_dim, hidden_dim)
    w21, b21 = linear(k21, hidden_dim, latent_dim)
    w22, b22 = linear(k22, hidden_dim, latent_dim)
    w3, b3 = linear(k3, latent_dim, hidden_dim)
    w4, b4 = linear(k4, hidden_dim, input_dim)
    return {"w1": w1, "b1": b1, "w21": w21, "b21": b21, "w22": w22, "b22": b22,
            "w3": w3, "b3": b3, "w4": w4, "b4": b4}


def reference_forward(x, eps, p, bf16_matmul=True):
    """Pure-JAX reference. bf16_matmul=True mirrors the kernel's mixed precision."""
    if bf16_matmul:
        def mm(a, w):
            return jnp.dot(a.astype(jnp.bfloat16), w.astype(jnp.bfloat16),
                           preferred_element_type=jnp.float32)
    else:
        def mm(a, w):
            return jnp.dot(a, w)
    h1 = jnp.maximum(mm(x, p["w1"]) + p["b1"], 0.0)
    mu = mm(h1, p["w21"]) + p["b21"]
    logvar = mm(h1, p["w22"]) + p["b22"]
    z = mu + eps * jnp.exp(0.5 * logvar)
    h3 = jnp.maximum(mm(z, p["w3"]) + p["b3"], 0.0)
    logits = mm(h3, p["w4"]) + p["b4"]
    return jax.nn.log_softmax(logits, axis=1), mu, logvar


if __name__ == "__main__":
    # Small shapes consistent with the module (hidden/latent are the module defaults).
    B, INPUT_DIM, HIDDEN_DIM, LATENT_DIM = 8, 64, 50, 10

    key = jax.random.PRNGKey(0)
    kx, keps, kp = jax.random.split(key, 3)

    x = jax.random.normal(kx, (B, INPUT_DIM), jnp.float32)
    # TODO(synk): torch.randn_like(std) inside reparameterize has no in-kernel
    # equivalent tied to torch's RNG; eps is sampled in the wrapper and passed in
    # so the kernel itself stays deterministic.
    eps = jax.random.normal(keps, (B, LATENT_DIM), jnp.float32)
    params = init_params(kp, INPUT_DIM, HIDDEN_DIM, LATENT_DIM)

    recon, mu, logvar = vae_forward(x, eps, params)
    jax.block_until_ready((recon, mu, logvar))

    # Tight check vs. a reference using the same bf16-operand / f32-accumulate dots.
    r_bf, mu_bf, lv_bf = reference_forward(x, eps, params, bf16_matmul=True)
    assert jnp.allclose(recon, r_bf, atol=1e-2, rtol=1e-2), "recon mismatch (bf16 ref)"
    assert jnp.allclose(mu, mu_bf, atol=1e-2, rtol=1e-2), "mu mismatch (bf16 ref)"
    assert jnp.allclose(logvar, lv_bf, atol=1e-2, rtol=1e-2), "logvar mismatch (bf16 ref)"

    # Semantic sanity check vs. the full-f32 PyTorch-equivalent math.
    r_32, mu_32, lv_32 = reference_forward(x, eps, params, bf16_matmul=False)
    assert jnp.allclose(recon, r_32, atol=5e-2, rtol=5e-2), "recon mismatch (f32 ref)"
    assert jnp.allclose(mu, mu_32, atol=5e-2, rtol=5e-2), "mu mismatch (f32 ref)"
    assert jnp.allclose(logvar, lv_32, atol=5e-2, rtol=5e-2), "logvar mismatch (f32 ref)"

    print("KERNEL_OK")
</pallas_src>

<mosaic_0001>
module attributes {stable_mosaic.version = 11 : i64} {
  func.func @vae_kernel(%arg0: i32, %arg1: memref<8x128xf32, #tpu.memory_space<vmem>>, %arg2: memref<8x128xf32, #tpu.memory_space<vmem>>, %arg3: memref<128x128xbf16, #tpu.memory_space<vmem>>, %arg4: memref<1x128xf32, #tpu.memory_space<vmem>>, %arg5: memref<128x256xbf16, #tpu.memory_space<vmem>>, %arg6: memref<1x256xf32, #tpu.memory_space<vmem>>, %arg7: memref<128x128xbf16, #tpu.memory_space<vmem>>, %arg8: memref<1x128xf32, #tpu.memory_space<vmem>>, %arg9: memref<128x128xbf16, #tpu.memory_space<vmem>>, %arg10: memref<1x128xf32, #tpu.memory_space<vmem>>, %arg11: memref<8x128xf32, #tpu.memory_space<vmem>>, %arg12: memref<8x256xf32, #tpu.memory_space<vmem>>) attributes {dimension_semantics = [#tpu.dimension_semantics<parallel>], iteration_bounds = array<i64: 1>, scalar_prefetch = 0 : i64, scratch_operands = 0 : i64, tpu.core_type = #tpu.core_type<tc>, window_params = [{transform_indices = @transform_0, window_bounds = array<i64: 8, 128>}, {transform_indices = @transform_1, window_bounds = array<i64: 8, 128>}, {pipeline_mode = #tpu.pipeline_mode<synchronous>, transform_indices = @transform_2, window_bounds = array<i64: 128, 128>}, {pipeline_mode = #tpu.pipeline_mode<synchronous>, transform_indices = @transform_3, window_bounds = array<i64: 1, 128>}, {pipeline_mode = #tpu.pipeline_mode<synchronous>, transform_indices = @transform_4, window_bounds = array<i64: 128, 256>}, {pipeline_mode = #tpu.pipeline_mode<synchronous>, transform_indices = @transform_5, window_bounds = array<i64: 1, 256>}, {pipeline_mode = #tpu.pipeline_mode<synchronous>, transform_indices = @transform_6, window_bounds = array<i64: 128, 128>}, {pipeline_mode = #tpu.pipeline_mode<synchronous>, transform_indices = @transform_7, window_bounds = array<i64: 1, 128>}, {pipeline_mode = #tpu.pipeline_mode<synchronous>, transform_indices = @transform_8, window_bounds = array<i64: 128, 128>}, {pipeline_mode = #tpu.pipeline_mode<synchronous>, transform_indices = @transform_9, window_bounds = array<i64: 1, 128>}, {transform_indices = @transform_10, window_bounds = array<i64: 8, 128>}, {transform_indices = @transform_11, window_bounds = array<i64: 8, 256>}]} {
    %c0 = arith.constant 0 : index
    %c0_0 = arith.constant 0 : index
    %0 = vector.load %arg1[%c0, %c0_0] : memref<8x128xf32, #tpu.memory_space<vmem>>, vector<8x128xf32>
    %c0_1 = arith.constant 0 : index
    %c0_2 = arith.constant 0 : index
    %1 = vector.load %arg2[%c0_1, %c0_2] : memref<8x128xf32, #tpu.memory_space<vmem>>, vector<8x128xf32>
    %2 = arith.truncf %0 : vector<8x128xf32> to vector<8x128xbf16>
    %c0_3 = arith.constant 0 : index
    %c0_4 = arith.constant 0 : index
    %3 = vector.load %arg3[%c0_3, %c0_4] : memref<128x128xbf16, #tpu.memory_space<vmem>>, vector<128x128xbf16>
    %cst = arith.constant dense<0.000000e+00> : vector<8x128xf32>
    %4 = tpu.matmul %2, %3, %cst {dimension_numbers = #tpu.dot_dimension_numbers<[1], [0], [0], [1], [0, 0, 1, 1], [], []>} : vector<8x128xbf16>, vector<128x128xbf16>, vector<8x128xf32> -> vector<8x128xf32>
    %c0_5 = arith.constant 0 : index
    %c0_6 = arith.constant 0 : index
    %5 = vector.load %arg4[%c0_5, %c0_6] : memref<1x128xf32, #tpu.memory_space<vmem>>, vector<1x128xf32>
    %6 = vector.broadcast %5 : vector<1x128xf32> to vector<8x128xf32>
    %7 = arith.addf %4, %6 : vector<8x128xf32>
    %cst_7 = arith.constant 0.000000e+00 : f32
    %8 = vector.broadcast %cst_7 : f32 to vector<8x128xf32>
    %9 = arith.maximumf %7, %8 : vector<8x128xf32>
    %10 = arith.truncf %9 : vector<8x128xf32> to vector<8x128xbf16>
    %c0_8 = arith.constant 0 : index
    %c0_9 = arith.constant 0 : index
    %11 = vector.load %arg5[%c0_8, %c0_9] : memref<128x256xbf16, #tpu.memory_space<vmem>>, vector<128x256xbf16>
    %cst_10 = arith.constant dense<0.000000e+00> : vector<8x256xf32>
    %12 = tpu.matmul %10, %11, %cst_10 {dimension_numbers = #tpu.dot_dimension_numbers<[1], [0], [0], [1], [0, 0, 1, 1], [], []>} : vector<8x128xbf16>, vector<128x256xbf16>, vector<8x256xf32> -> vector<8x256xf32>
    %c0_11 = arith.constant 0 : index
    %c0_12 = arith.constant 0 : index
    %13 = vector.load %arg6[%c0_11, %c0_12] : memref<1x256xf32, #tpu.memory_space<vmem>>, vector<1x256xf32>
    %14 = vector.broadcast %13 : vector<1x256xf32> to vector<8x256xf32>
    %15 = arith.addf %12, %14 : vector<8x256xf32>
    %16 = vector.extract_strided_slice %15 {offsets = [0, 0], sizes = [8, 128], strides = [1, 1]} : vector<8x256xf32> to vector<8x128xf32>
    %17 = vector.extract_strided_slice %15 {offsets = [0, 128], sizes = [8, 128], strides = [1, 1]} : vector<8x256xf32> to vector<8x128xf32>
    %cst_13 = arith.constant 5.000000e-01 : f32
    %18 = vector.broadcast %cst_13 : f32 to vector<8x128xf32>
    %19 = arith.mulf %18, %17 : vector<8x128xf32>
    %20 = math.exp %19 : vector<8x128xf32>
    %21 = arith.mulf %1, %20 : vector<8x128xf32>
    %22 = arith.addf %16, %21 : vector<8x128xf32>
    %23 = arith.truncf %22 : vector<8x128xf32> to vector<8x128xbf16>
    %c0_14 = arith.constant 0 : index
    %c0_15 = arith.constant 0 : index
    %24 = vector.load %arg7[%c0_14, %c0_15] : memref<128x128xbf16, #tpu.memory_space<vmem>>, vector<128x128xbf16>
    %cst_16 = arith.constant dense<0.000000e+00> : vector<8x128xf32>
    %25 = tpu.matmul %23, %24, %cst_16 {dimension_numbers = #tpu.dot_dimension_numbers<[1], [0], [0], [1], [0, 0, 1, 1], [], []>} : vector<8x128xbf16>, vector<128x128xbf16>, vector<8x128xf32> -> vector<8x128xf32>
    %c0_17 = arith.constant 0 : index
    %c0_18 = arith.constant 0 : index
    %26 = vector.load %arg8[%c0_17, %c0_18] : memref<1x128xf32, #tpu.memory_space<vmem>>, vector<1x128xf32>
    %27 = vector.broadcast %26 : vector<1x128xf32> to vector<8x128xf32>
    %28 = arith.addf %25, %27 : vector<8x128xf32>
    %cst_19 = arith.constant 0.000000e+00 : f32
    %29 = vector.broadcast %cst_19 : f32 to vector<8x128xf32>
    %30 = arith.maximumf %28, %29 : vector<8x128xf32>
    %31 = arith.truncf %30 : vector<8x128xf32> to vector<8x128xbf16>
    %c0_20 = arith.constant 0 : index
    %c0_21 = arith.constant 0 : index
    %32 = vector.load %arg9[%c0_20, %c0_21] : memref<128x128xbf16, #tpu.memory_space<vmem>>, vector<128x128xbf16>
    %cst_22 = arith.constant dense<0.000000e+00> : vector<8x128xf32>
    %33 = tpu.matmul %31, %32, %cst_22 {dimension_numbers = #tpu.dot_dimension_numbers<[1], [0], [0], [1], [0, 0, 1, 1], [], []>} : vector<8x128xbf16>, vector<128x128xbf16>, vector<8x128xf32> -> vector<8x128xf32>
    %c0_23 = arith.constant 0 : index
    %c0_24 = arith.constant 0 : index
    %34 = vector.load %arg10[%c0_23, %c0_24] : memref<1x128xf32, #tpu.memory_space<vmem>>, vector<1x128xf32>
    %35 = vector.broadcast %34 : vector<1x128xf32> to vector<8x128xf32>
    %36 = arith.addf %33, %35 : vector<8x128xf32>
    %37 = tpu.iota {dimensions = array<i32: 1>} : vector<8x128xi32>
    %c64_i32 = arith.constant 64 : i32
    %38 = vector.broadcast %c64_i32 : i32 to vector<8x128xi32>
    %39 = arith.cmpi slt, %37, %38 : vector<8x128xi32>
    %cst_25 = arith.constant -1.000000e+30 : f32
    %40 = vector.broadcast %cst_25 : f32 to vector<8x128xf32>
    %41 = arith.select %39, %36, %40 : vector<8x128xi1>, vector<8x128xf32>
    %cst_26 = arith.constant dense<0xFF800000> : vector<8xf32>
    %42 = vector.multi_reduction <maximumf>, %41, %cst_26 [1] : vector<8x128xf32> to vector<8xf32>
    %43 = vector.shape_cast %42 : vector<8xf32> to vector<8x1xf32>
    %44 = vector.broadcast %43 : vector<8x1xf32> to vector<8x128xf32>
    %45 = arith.subf %41, %44 : vector<8x128xf32>
    %46 = math.exp %45 : vector<8x128xf32>
    %cst_27 = arith.constant dense<0.000000e+00> : vector<8xf32>
    %47 = vector.multi_reduction <add>, %46, %cst_27 [1] : vector<8x128xf32> to vector<8xf32>
    %48 = vector.shape_cast %47 : vector<8xf32> to vector<8x1xf32>
    %49 = math.log %48 : vector<8x1xf32>
    %50 = vector.broadcast %49 : vector<8x1xf32> to vector<8x128xf32>
    %51 = arith.subf %45, %50 : vector<8x128xf32>
    %c0_28 = arith.constant 0 : index
    %c0_29 = arith.constant 0 : index
    %52 = vector.load %arg11[%c0_28, %c0_29] : memref<8x128xf32, #tpu.memory_space<vmem>>, vector<8x128xf32>
    tpu.vector_store %arg11[%c0_28, %c0_29], %51 {strides = array<i32>} : memref<8x128xf32, #tpu.memory_space<vmem>>, vector<8x128xf32>,
    %c0_30 = arith.constant 0 : index
    %c0_31 = arith.constant 0 : index
    %53 = vector.load %arg12[%c0_30, %c0_31] : memref<8x256xf32, #tpu.memory_space<vmem>>, vector<8x256xf32>
    tpu.vector_store %arg12[%c0_30, %c0_31], %15 {strides = array<i32>} : memref<8x256xf32, #tpu.memory_space<vmem>>, vector<8x256xf32>,
    return
  }
  func.func @transform_0(%arg0: i32) -> (i32, i32) {
    %c0_i32 = arith.constant 0 : i32
    %c0_i32_0 = arith.constant 0 : i32
    return %arg0, %c0_i32 : i32, i32
  }
  func.func @transform_1(%arg0: i32) -> (i32, i32) {
    %c0_i32 = arith.constant 0 : i32
    %c0_i32_0 = arith.constant 0 : i32
    return %arg0, %c0_i32 : i32, i32
  }
  func.func @transform_2(%arg0: i32) -> (i32, i32) {
    %c0_i32 = arith.constant 0 : i32
    %c0_i32_0 = arith.constant 0 : i32
    %c0_i32_1 = arith.constant 0 : i32
    return %c0_i32, %c0_i32_0 : i32, i32
  }
  func.func @transform_3(%arg0: i32) -> (i32, i32) {
    %c0_i32 = arith.constant 0 : i32
    %c0_i32_0 = arith.constant 0 : i32
    %c0_i32_1 = arith.constant 0 : i32
    return %c0_i32, %c0_i32_0 : i32, i32
  }
  func.func @transform_4(%arg0: i32) -> (i32, i32) {
    %c0_i32 = arith.constant 0 : i32
    %c0_i32_0 = arith.constant 0 : i32
    %c0_i32_1 = arith.constant 0 : i32
    return %c0_i32, %c0_i32_0 : i32, i32
  }
  func.func @transform_5(%arg0: i32) -> (i32, i32) {
    %c0_i32 = arith.constant 0 : i32
    %c0_i32_0 = arith.constant 0 : i32
    %c0_i32_1 = arith.constant 0 : i32
    return %c0_i32, %c0_i32_0 : i32, i32
  }
  func.func @transform_6(%arg0: i32) -> (i32, i32) {
    %c0_i32 = arith.constant 0 : i32
    %c0_i32_0 = arith.constant 0 : i32
    %c0_i32_1 = arith.constant 0 : i32
    return %c0_i32, %c0_i32_0 : i32, i32
  }
  func.func @transform_7(%arg0: i32) -> (i32, i32) {
    %c0_i32 = arith.constant 0 : i32
    %c0_i32_0 = arith.constant 0 : i32
    %c0_i32_1 = arith.constant 0 : i32
    return %c0_i32, %c0_i32_0 : i32, i32
  }
  func.func @transform_8(%arg0: i32) -> (i32, i32) {
    %c0_i32 = arith.constant 0 : i32
    %c0_i32_0 = arith.constant 0 : i32
    %c0_i32_1 = arith.constant 0 : i32
    return %c0_i32, %c0_i32_0 : i32, i32
  }
  func.func @transform_9(%arg0: i32) -> (i32, i32) {
    %c0_i32 = arith.constant 0 : i32
    %c0_i32_0 = arith.constant 0 : i32
    %c0_i32_1 = arith.constant 0 : i32
    return %c0_i32, %c0_i32_0 : i32, i32
  }
  func.func @transform_10(%arg0: i32) -> (i32, i32) {
    %c0_i32 = arith.constant 0 : i32
    %c0_i32_0 = arith.constant 0 : i32
    return %arg0, %c0_i32 : i32, i32
  }
  func.func @transform_11(%arg0: i32) -> (i32, i32) {
    %c0_i32 = arith.constant 0 : i32
    %c0_i32_0 = arith.constant 0 : i32
    return %arg0, %c0_i32 : i32, i32
  }
}

</mosaic_0001>

<llo_original>
// kernel: tpu_custom_call.1
$region0: #{tpu_custom_call.1}
  #allocation0 [shape = 'u32[]', space=smem, size = 0x4, offset = 0x4, fixed_abs, tag = 'smem constant byte address 0x4 - core index']
  #allocation1 [shape = 'u32[144,128]{1,0:T(1,128)}', space=vmem, size = 0x12000, scoped, tag = 'internal scratch']
  %s0 = inlined_call_operand.hbm [shape: f32[8,128], index: 0, kind: input, shape index: {}]
  %s1 = inlined_call_operand.hbm [shape: f32[8,128], index: 1, kind: input, shape index: {}]
  %s2 = inlined_call_operand.hbm [shape: bf16[128,128], index: 2, kind: input, shape index: {}]
  %s3 = inlined_call_operand.vmem [shape: f32[1,128], index: 3, kind: input, shape index: {}]
  %s4 = inlined_call_operand.hbm [shape: bf16[128,256], index: 4, kind: input, shape index: {}]
  %s5 = inlined_call_operand.vmem [shape: f32[1,256], index: 5, kind: input, shape index: {}]
  %s6 = inlined_call_operand.hbm [shape: bf16[128,128], index: 6, kind: input, shape index: {}]
  %s7 = inlined_call_operand.vmem [shape: f32[1,128], index: 7, kind: input, shape index: {}]
  %s8 = inlined_call_operand.hbm [shape: bf16[128,128], index: 8, kind: input, shape index: {}]
  %s9 = inlined_call_operand.vmem [shape: f32[1,128], index: 9, kind: input, shape index: {}]
  %s10 = inlined_call_operand.hbm [shape: f32[8,128], index: 10, kind: output, shape index: {0}]
  %s11 = inlined_call_operand.hbm [shape: f32[8,256], index: 11, kind: output, shape index: {1}]
  %12 = xla_tuple %s10, %s11
  %s13 = sld [smem:[#allocation0]]
  $region82: #{tpu_custom_call.1} parent=0
    _
  %s15 = ssub.s32 1, %s13
  %s16 = scalar_select 0, %s15, %s13
  $region1: #{tpu_custom_call.1} parent=0
    #allocation2 [shape = 'u8[4096]{0}', space=vmem, size = 0x1000, scoped, tag = 'input window, operand 0, single buffered']
    #allocation3 [shape = 's32[1]{0}', space=sflag, size = 0x4, scoped, tag = 'scoped memory for tpu_custom_call.1']
    #allocation4 [shape = 's32[1]{0}', space=sflag, size = 0x4, scoped, tag = 'scoped memory for tpu_custom_call.1']
    #allocation5 [shape = 'u8[4096]{0}', space=vmem, size = 0x1000, scoped, tag = 'input window, operand 1, single buffered']
    #allocation6 [shape = 's32[1]{0}', space=sflag, size = 0x4, scoped, tag = 'scoped memory for tpu_custom_call.1']
    #allocation7 [shape = 'u8[32768]{0}', space=vmem, size = 0x8000, scoped, tag = 'input window, operand 2, single buffered']
    #allocation8 [shape = 'u8[65536]{0}', space=vmem, size = 0x10000, scoped, tag = 'input window, operand 4, single buffered']
    #allocation9 [shape = 's32[1]{0}', space=sflag, size = 0x4, scoped, tag = 'scoped memory for tpu_custom_call.1']
    #allocation10 [shape = 'u8[32768]{0}', space=vmem, size = 0x8000, scoped, tag = 'input window, operand 6, single buffered']
    #allocation11 [shape = 'u8[32768]{0}', space=vmem, size = 0x8000, scoped, tag = 'input window, operand 8, single buffered']
    #allocation12 [shape = 's32[1]{0}', space=sflag, size = 0x4, scoped, tag = 'scoped memory for tpu_custom_call.1']
    #allocation13 [shape = 'u8[4096]{0}', space=vmem, size = 0x1000, scoped, tag = 'output window, operand 0, single buffered']
    #allocation14 [shape = 'u8[8192]{0}', space=vmem, size = 0x2000, scoped, tag = 'output window, operand 1, single buffered']
    #allocation15 [shape = 's32[1]{0}', space=sflag, size = 0x4, scoped, tag = 'scoped memory for tpu_custom_call.1']
    %17 = vsyncpa [#allocation3], 0
    %18 = vsyncpa [#allocation6], 0
    %19 = vsyncpa [#allocation9], 0
    %20 = vsyncpa [#allocation12], 0
    %21 = vsyncpa [#allocation4], 0
    %22 = vsyncpa [#allocation15], 0
    // Predicated region
    $region2: #{tpu_custom_call.1} parent=1 // pred_check
      _
    $region3: #{tpu_custom_call.1} parent=1 // pred_check_branch
      %24 = sbr.rel (0) target = $region5
    $region4: #{tpu_custom_call.1} parent=1 // pred_region
      %s26 = ssub.s32 128, 128
      %27 = vsyncadd [#allocation3], %s26
      %s29 = sshll.u32 [#allocation2], 4
      %s30 = int_to_ptr.vmem [resolvable:$true] %s29
      %32 = dma.hbm_to_vmem [thread:$0]  %s0, 128, %s30, [#allocation3]
    $region5: #{tpu_custom_call.1} parent=1 // pred_fallthru
      _
    // Predicated region
    $region6: #{tpu_custom_call.1} parent=1 // pred_check
      _
    $region7: #{tpu_custom_call.1} parent=1 // pred_check_branch
      %34 = sbr.rel (0) target = $region9
    $region8: #{tpu_custom_call.1} parent=1 // pred_region
      %s36 = ssub.s32 128, 128
      %37 = vsyncadd [#allocation6], %s36
      %s39 = sshll.u32 [#allocation5], 4
      %s40 = int_to_ptr.vmem [resolvable:$true] %s39
      %42 = dma.hbm_to_vmem [thread:$0]  %s1, 128, %s40, [#allocation6]
    $region9: #{tpu_custom_call.1} parent=1 // pred_fallthru
      _
    // Predicated region
    $region10: #{tpu_custom_call.1} parent=1 // pred_check
      _
    $region11: #{tpu_custom_call.1} parent=1 // pred_check_branch
      %44 = sbr.rel (0) target = $region13
    $region12: #{tpu_custom_call.1} parent=1 // pred_region
      %s46 = ssub.s32 1024, 1024
      %47 = vsyncadd [#allocation6], %s46
      %s48 = sshll.u32 [#allocation7], 4
      %s49 = int_to_ptr.vmem [resolvable:$true] %s48
      %54 = dma.hbm_to_vmem [thread:$0]  %s2, 1024, %s49, [#allocation6], 64, 64, 4
    $region13: #{tpu_custom_call.1} parent=1 // pred_fallthru
      _
    // Predicated region
    $region14: #{tpu_custom_call.1} parent=1 // pred_check
      _
    $region15: #{tpu_custom_call.1} parent=1 // pred_check_branch
      %56 = sbr.rel (0) target = $region17
    $region16: #{tpu_custom_call.1} parent=1 // pred_region
      _
    $region17: #{tpu_custom_call.1} parent=1 // pred_fallthru
      _
    // Predicated region
    $region18: #{tpu_custom_call.1} parent=1 // pred_check
      _
    $region19: #{tpu_custom_call.1} parent=1 // pred_check_branch
      %58 = sbr.rel (0) target = $region21
    $region20: #{tpu_custom_call.1} parent=1 // pred_region
      %s60 = ssub.s32 2048, 2048
      %61 = vsyncadd [#allocation9], %s60
      %s62 = sshll.u32 [#allocation8], 4
      %s63 = int_to_ptr.vmem [resolvable:$true] %s62
      %68 = dma.hbm_to_vmem [thread:$0]  %s4, 2048, %s63, [#allocation9], 128, 128, 8
    $region21: #{tpu_custom_call.1} parent=1 // pred_fallthru
      _
    // Predicated region
    $region22: #{tpu_custom_call.1} parent=1 // pred_check
      _
    $region23: #{tpu_custom_call.1} parent=1 // pred_check_branch
      %70 = sbr.rel (0) target = $region25
    $region24: #{tpu_custom_call.1} parent=1 // pred_region
      _
    $region25: #{tpu_custom_call.1} parent=1 // pred_fallthru
      _
    // Predicated region
    $region26: #{tpu_custom_call.1} parent=1 // pred_check
      _
    $region27: #{tpu_custom_call.1} parent=1 // pred_check_branch
      %72 = sbr.rel (0) target = $region29
    $region28: #{tpu_custom_call.1} parent=1 // pred_region
      %s74 = ssub.s32 1024, 1024
      %75 = vsyncadd [#allocation9], %s74
      %s76 = sshll.u32 [#allocation10], 4
      %s77 = int_to_ptr.vmem [resolvable:$true] %s76
      %82 = dma.hbm_to_vmem [thread:$0]  %s6, 1024, %s77, [#allocation9], 64, 64, 4
    $region29: #{tpu_custom_call.1} parent=1 // pred_fallthru
      _
    // Predicated region
    $region30: #{tpu_custom_call.1} parent=1 // pred_check
      _
    $region31: #{tpu_custom_call.1} parent=1 // pred_check_branch
      %84 = sbr.rel (0) target = $region33
    $region32: #{tpu_custom_call.1} parent=1 // pred_region
      _
    $region33: #{tpu_custom_call.1} parent=1 // pred_fallthru
      _
    // Predicated region
    $region34: #{tpu_custom_call.1} parent=1 // pred_check
      _
    $region35: #{tpu_custom_call.1} parent=1 // pred_check_branch
      %86 = sbr.rel (0) target = $region37
    $region36: #{tpu_custom_call.1} parent=1 // pred_region
      %s88 = ssub.s32 1024, 1024
      %89 = vsyncadd [#allocation12], %s88
      %s90 = sshll.u32 [#allocation11], 4
      %s91 = int_to_ptr.vmem [resolvable:$true] %s90
      %96 = dma.hbm_to_vmem [thread:$0]  %s8, 1024, %s91, [#allocation12], 64, 64, 4
    $region37: #{tpu_custom_call.1} parent=1 // pred_fallthru
      _
    // Predicated region
    $region38: #{tpu_custom_call.1} parent=1 // pred_check
      _
    $region39: #{tpu_custom_call.1} parent=1 // pred_check_branch
      %98 = sbr.rel (0) target = $region41
    $region40: #{tpu_custom_call.1} parent=1 // pred_region
      _
    $region41: #{tpu_custom_call.1} parent=1 // pred_fallthru
      _
    // Predicated region
    $region42: #{tpu_custom_call.1} parent=1 // pred_check
      _
    $region43: #{tpu_custom_call.1} parent=1 // pred_check_branch
      %100 = sbr.rel (0) target = $region45
    $region44: #{tpu_custom_call.1} parent=1 // pred_region
      %101 = dma.done [#allocation3], 128
    $region45: #{tpu_custom_call.1} parent=1 // pred_fallthru
      _
    // Predicated region
    $region46: #{tpu_custom_call.1} parent=1 // pred_check
      _
    $region47: #{tpu_custom_call.1} parent=1 // pred_check_branch
      %103 = sbr.rel (0) target = $region49
    $region48: #{tpu_custom_call.1} parent=1 // pred_region
      %104 = dma.done [#allocation6], 128
    $region49: #{tpu_custom_call.1} parent=1 // pred_fallthru
      _
    // Predicated region
    $region50: #{tpu_custom_call.1} parent=1 // pred_check
      _
    $region51: #{tpu_custom_call.1} parent=1 // pred_check_branch
      %106 = sbr.rel (0) target = $region53
    $region52: #{tpu_custom_call.1} parent=1 // pred_region
      %107 = dma.done [#allocation6], 1024
    $region53: #{tpu_custom_call.1} parent=1 // pred_fallthru
      _
    // Predicated region
    $region54: #{tpu_custom_call.1} parent=1 // pred_check
      _
    $region55: #{tpu_custom_call.1} parent=1 // pred_check_branch
      %109 = sbr.rel (0) target = $region57
    $region56: #{tpu_custom_call.1} parent=1 // pred_region
      %110 = dma.done [#allocation9], 2048
    $region57: #{tpu_custom_call.1} parent=1 // pred_fallthru
      _
    // Predicated region
    $region58: #{tpu_custom_call.1} parent=1 // pred_check
      _
    $region59: #{tpu_custom_call.1} parent=1 // pred_check_branch
      %112 = sbr.rel (0) target = $region61
    $region60: #{tpu_custom_call.1} parent=1 // pred_region
      %113 = dma.done [#allocation9], 1024
    $region61: #{tpu_custom_call.1} parent=1 // pred_fallthru
      _
    // Predicated region
    $region62: #{tpu_custom_call.1} parent=1 // pred_check
      _
    $region63: #{tpu_custom_call.1} parent=1 // pred_check_branch
      %115 = sbr.rel (0) target = $region65
    $region64: #{tpu_custom_call.1} parent=1 // pred_region
      %116 = dma.done [#allocation12], 1024
    $region65: #{tpu_custom_call.1} parent=1 // pred_fallthru
      _
    %v118 = vld [vmem:[#allocation2] sm:$0xff]
    %v119 = vld [vmem:[#allocation5] sm:$0xff]
    %v120 = vpack.c.bf16 %v118, %v118
    %v121 = vld [vmem:[#allocation7] sm:$0xf]
    %v122 = vld [vmem:[#allocation7 + $0x4] sm:$0xf]
    %v123 = vld [vmem:[#allocation7 + $0x8] sm:$0xf]
    %v124 = vld [vmem:[#allocation7 + $0xc] sm:$0xf]
    %v125 = vld [vmem:[#allocation7 + $0x10] sm:$0xf]
    %v126 = vld [vmem:[#allocation7 + $0x14] sm:$0xf]
    %v127 = vld [vmem:[#allocation7 + $0x18] sm:$0xf]
    %v128 = vld [vmem:[#allocation7 + $0x1c] sm:$0xf]
    %v129 = vld [vmem:[#allocation7 + $0x20] sm:$0xf]
    %v130 = vld [vmem:[#allocation7 + $0x24] sm:$0xf]
    %v131 = vld [vmem:[#allocation7 + $0x28] sm:$0xf]
    %v132 = vld [vmem:[#allocation7 + $0x2c] sm:$0xf]
    %v133 = vld [vmem:[#allocation7 + $0x30] sm:$0xf]
    %v134 = vld [vmem:[#allocation7 + $0x34] sm:$0xf]
    %v135 = vld [vmem:[#allocation7 + $0x38] sm:$0xf]
    %v136 = vld [vmem:[#allocation7 + $0x3c] sm:$0xf]
    %v137 = vld [vmem:[%s3] sm:$0x1]
    %v139 = vlaneseq
    %v140 = vshrl.u32 %v139, 7
    %v141 = vsub.s32 0, %v140
    %v142 = vrot.slane %v137, %v141
    %v160 = vunpack.c.l.b16 %v121
    %v161 = vunpack.c.l.b16 %v122
    %v162 = vunpack.c.l.b16 %v123
    %v163 = vunpack.c.l.b16 %v124
    %v164 = vunpack.c.l.b16 %v125
    %v165 = vunpack.c.l.b16 %v126
    %v166 = vunpack.c.l.b16 %v127
    %v167 = vunpack.c.l.b16 %v128
    %v168 = vunpack.c.l.b16 %v129
    %v169 = vunpack.c.l.b16 %v130
    %v170 = vunpack.c.l.b16 %v131
    %v171 = vunpack.c.l.b16 %v132
    %v172 = vunpack.c.l.b16 %v133
    %v173 = vunpack.c.l.b16 %v134
    %v174 = vunpack.c.l.b16 %v135
    %v175 = vunpack.c.l.b16 %v136
    %v176 = vpack.c.b16 %v161, %v160
    %v177 = vpack.c.b16 %v163, %v162
    %v178 = vpack.c.b16 %v165, %v164
    %v179 = vpack.c.b16 %v167, %v166
    %v180 = vpack.c.b16 %v169, %v168
    %v181 = vpack.c.b16 %v171, %v170
    %v182 = vpack.c.b16 %v173, %v172
    %v183 = vpack.c.b16 %v175, %v174
    %192 = vmatprep.subr.bf16.mxu0 0
    %193 = vmatpush1.bf16.msra.mxu0 %v183
    %194 = vmatprep.subr.bf16.mxu0 0
    %195 = vmatpush1.bf16.msra.mxu0 %v182
    %196 = vmatprep.subr.bf16.mxu0 0
    %197 = vmatpush1.bf16.msra.mxu0 %v181
    %198 = vmatprep.subr.bf16.mxu0 0
    %199 = vmatpush1.bf16.msra.mxu0 %v180
    %200 = vmatprep.subr.bf16.mxu0 0
    %201 = vmatpush1.bf16.msra.mxu0 %v179
    %202 = vmatprep.subr.bf16.mxu0 0
    %203 = vmatpush1.bf16.msra.mxu0 %v178
    %204 = vmatprep.subr.bf16.mxu0 0
    %205 = vmatpush1.bf16.msra.mxu0 %v177
    %206 = vmatprep.subr.bf16.mxu0 0
    %207 = vmatpush1.bf16.msra.mxu0 %v176
    %208 = vmatprep.subr.bf16.mxu0 0
    %209 = vmatpush2.bf16.msra.mxu0 0
    %210 = vmatprep.subr.bf16.mxu0 0
    %211 = vmatpush2.bf16.msra.mxu0 0
    %212 = vmatprep.subr.bf16.mxu0 0
    %213 = vmatpush2.bf16.msra.mxu0 0
    %214 = vmatprep.subr.bf16.mxu0 0
    %215 = vmatpush2.bf16.msra.mxu0 0
    %216 = vmatprep.subr.bf16.mxu0 0
    %217 = vmatpush2.bf16.msra.mxu0 0
    %218 = vmatprep.subr.bf16.mxu0 0
    %219 = vmatpush2.bf16.msra.mxu0 0
    %220 = vmatprep.subr.bf16.mxu0 0
    %221 = vmatpush2.bf16.msra.mxu0 0
    %222 = vmatprep.subr.bf16.mxu0 0
    %223 = vmatpush2.bf16.msra.mxu0 0
    %224 = vmatprep.mubr.bf16.mxu0 0
    %225 = vmatmul.mubr.bf16.gmra.mxu0 %v120
    %v226 = vpop.f32.mrf.mxu0
    %v227 = vadd.f32 %v142, %v226
    %v228 = vpop.f32.mrf.mxu0
    %v229 = vpop.f32.mrf.mxu0
    %v230 = vpop.f32.mrf.mxu0
    %231 = vdwg.mxu0
    %v232 = vmax.f32 %v227, 0.0
    %v233 = vpack.c.bf16 %v232, %v232
    %v234 = vld [vmem:[#allocation8] sm:$0xff]
    %v235 = vld [vmem:[#allocation8 + $0x8] sm:$0xff]
    %v236 = vld [vmem:[#allocation8 + $0x10] sm:$0xff]
    %v237 = vld [vmem:[#allocation8 + $0x18] sm:$0xff]
    %v238 = vld [vmem:[#allocation8 + $0x20] sm:$0xff]
    %v239 = vld [vmem:[#allocation8 + $0x28] sm:$0xff]
    %v240 = vld [vmem:[#allocation8 + $0x30] sm:$0xff]
    %v241 = vld [vmem:[#allocation8 + $0x38] sm:$0xff]
    %v242 = vld [vmem:[#allocation8 + $0x40] sm:$0xff]
    %v243 = vld [vmem:[#allocation8 + $0x48] sm:$0xff]
    %v244 = vld [vmem:[#allocation8 + $0x50] sm:$0xff]
    %v245 = vld [vmem:[#allocation8 + $0x58] sm:$0xff]
    %v246 = vld [vmem:[#allocation8 + $0x60] sm:$0xff]
    %v247 = vld [vmem:[#allocation8 + $0x68] sm:$0xff]
    %v248 = vld [vmem:[#allocation8 + $0x70] sm:$0xff]
    %v249 = vld [vmem:[#allocation8 + $0x78] sm:$0xff]
    %v250 = vld [vmem:[%s5] sm:$0x3]
    %v252 = vlaneseq
    %v253 = vshrl.u32 %v252, 7
    %v254 = vsub.s32 0, %v253
    %v255 = vrot.slane %v250, %v254
    %v256 = vlaneseq
    %v257 = vshrl.u32 %v256, 7
    %v258 = vsub.s32 1, %v257
    %v259 = vrot.slane %v250, %v258
    %v278 = vunpack.c.l.b16 %v234
    %v279 = vunpack.c.h.b16 %v234
    %v280 = vunpack.c.l.b16 %v235
    %v281 = vunpack.c.h.b16 %v235
    %v282 = vunpack.c.l.b16 %v236
    %v283 = vunpack.c.h.b16 %v236
    %v284 = vunpack.c.l.b16 %v237
    %v285 = vunpack.c.h.b16 %v237
    %v286 = vunpack.c.l.b16 %v238
    %v287 = vunpack.c.h.b16 %v238
    %v288 = vunpack.c.l.b16 %v239
    %v289 = vunpack.c.h.b16 %v239
    %v290 = vunpack.c.l.b16 %v240
    %v291 = vunpack.c.h.b16 %v240
    %v292 = vunpack.c.l.b16 %v241
    %v293 = vunpack.c.h.b16 %v241
    %v294 = vunpack.c.l.b16 %v242
    %v295 = vunpack.c.h.b16 %v242
    %v296 = vunpack.c.l.b16 %v243
    %v297 = vunpack.c.h.b16 %v243
    %v298 = vunpack.c.l.b16 %v244
    %v299 = vunpack.c.h.b16 %v244
    %v300 = vunpack.c.l.b16 %v245
    %v301 = vunpack.c.h.b16 %v245
    %v302 = vunpack.c.l.b16 %v246
    %v303 = vunpack.c.h.b16 %v246
    %v304 = vunpack.c.l.b16 %v247
    %v305 = vunpack.c.h.b16 %v247
    %v306 = vunpack.c.l.b16 %v248
    %v307 = vunpack.c.h.b16 %v248
    %v308 = vunpack.c.l.b16 %v249
    %v309 = vunpack.c.h.b16 %v249
    %v310 = vpack.c.b16 %v280, %v278
    %v311 = vpack.c.b16 %v281, %v279
    %v312 = vpack.c.b16 %v284, %v282
    %v313 = vpack.c.b16 %v285, %v283
    %v314 = vpack.c.b16 %v288, %v286
    %v315 = vpack.c.b16 %v289, %v287
    %v316 = vpack.c.b16 %v292, %v290
    %v317 = vpack.c.b16 %v293, %v291
    %v318 = vpack.c.b16 %v296, %v294
    %v319 = vpack.c.b16 %v297, %v295
    %v320 = vpack.c.b16 %v300, %v298
    %v321 = vpack.c.b16 %v301, %v299
    %v322 = vpack.c.b16 %v304, %v302
    %v323 = vpack.c.b16 %v305, %v303
    %v324 = vpack.c.b16 %v308, %v306
    %v325 = vpack.c.b16 %v309, %v307
    %342 = vmatprep.subr.bf16.mxu0 %v325
    %343 = vmatpush1.bf16.msra.mxu0 %v324
    %344 = vmatprep.subr.bf16.mxu0 %v323
    %345 = vmatpush1.bf16.msra.mxu0 %v322
    %346 = vmatprep.subr.bf16.mxu0 %v321
    %347 = vmatpush1.bf16.msra.mxu0 %v320
    %348 = vmatprep.subr.bf16.mxu0 %v319
    %349 = vmatpush1.bf16.msra.mxu0 %v318
    %350 = vmatprep.subr.bf16.mxu0 %v317
    %351 = vmatpush1.bf16.msra.mxu0 %v316
    %352 = vmatprep.subr.bf16.mxu0 %v315
    %353 = vmatpush1.bf16.msra.mxu0 %v314
    %354 = vmatprep.subr.bf16.mxu0 %v313
    %355 = vmatpush1.bf16.msra.mxu0 %v312
    %356 = vmatprep.subr.bf16.mxu0 %v311
    %357 = vmatpush1.bf16.msra.mxu0 %v310
    %358 = vmatprep.subr.bf16.mxu0 0
    %359 = vmatpush2.bf16.msra.mxu0 0
    %360 = vmatprep.subr.bf16.mxu0 0
    %361 = vmatpush2.bf16.msra.mxu0 0
    %362 = vmatprep.subr.bf16.mxu0 0
    %363 = vmatpush2.bf16.msra.mxu0 0
    %364 = vmatprep.subr.bf16.mxu0 0
    %365 = vmatpush2.bf16.msra.mxu0 0
    %366 = vmatprep.subr.bf16.mxu0 0
    %367 = vmatpush2.bf16.msra.mxu0 0
    %368 = vmatprep.subr.bf16.mxu0 0
    %369 = vmatpush2.bf16.msra.mxu0 0
    %370 = vmatprep.subr.bf16.mxu0 0
    %371 = vmatpush2.bf16.msra.mxu0 0
    %372 = vmatprep.subr.bf16.mxu0 0
    %373 = vmatpush2.bf16.msra.mxu0 0
    %374 = vmatprep.mubr.bf16.mxu0 0
    %375 = vmatmul.mubr.bf16.gmra.mxu0 %v233
    %v376 = vpop.f32.mrf.mxu0
    %v377 = vadd.f32 %v255, %v376
    %v378 = vpop.f32.mrf.mxu0
    %v379 = vadd.f32 %v259, %v378
    %v380 = vpop.f32.mrf.mxu0
    %v381 = vpop.f32.mrf.mxu0
    %382 = vdwg.mxu0
    %v383 = vmul.f32 %v379, 0.5
    %v384 = vmul.f32 %v383, 1.442695
    %v385 = vpow.pop %v384
    %v386 = vmul.f32 %v119, %v385
    %v387 = vadd.f32 %v377, %v386
    %v388 = vpack.c.bf16 %v387, %v387
    %v389 = vld [vmem:[#allocation10] sm:$0xf]
    %v390 = vld [vmem:[#allocation10 + $0x4] sm:$0xf]
    %v391 = vld [vmem:[#allocation10 + $0x8] sm:$0xf]
    %v392 = vld [vmem:[#allocation10 + $0xc] sm:$0xf]
    %v393 = vld [vmem:[#allocation10 + $0x10] sm:$0xf]
    %v394 = vld [vmem:[#allocation10 + $0x14] sm:$0xf]
    %v395 = vld [vmem:[#allocation10 + $0x18] sm:$0xf]
    %v396 = vld [vmem:[#allocation10 + $0x1c] sm:$0xf]
    %v397 = vld [vmem:[#allocation10 + $0x20] sm:$0xf]
    %v398 = vld [vmem:[#allocation10 + $0x24] sm:$0xf]
    %v399 = vld [vmem:[#allocation10 + $0x28] sm:$0xf]
    %v400 = vld [vmem:[#allocation10 + $0x2c] sm:$0xf]
    %v401 = vld [vmem:[#allocation10 + $0x30] sm:$0xf]
    %v402 = vld [vmem:[#allocation10 + $0x34] sm:$0xf]
    %v403 = vld [vmem:[#allocation10 + $0x38] sm:$0xf]
    %v404 = vld [vmem:[#allocation10 + $0x3c] sm:$0xf]
    %v405 = vld [vmem:[%s7] sm:$0x1]
    %v407 = vlaneseq
    %v408 = vshrl.u32 %v407, 7
    %v409 = vsub.s32 0, %v408
    %v410 = vrot.slane %v405, %v409
    %v428 = vunpack.c.l.b16 %v389
    %v429 = vunpack.c.l.b16 %v390
    %v430 = vunpack.c.l.b16 %v391
    %v431 = vunpack.c.l.b16 %v392
    %v432 = vunpack.c.l.b16 %v393
    %v433 = vunpack.c.l.b16 %v394
    %v434 = vunpack.c.l.b16 %v395
    %v435 = vunpack.c.l.b16 %v396
    %v436 = vunpack.c.l.b16 %v397
    %v437 = vunpack.c.l.b16 %v398
    %v438 = vunpack.c.l.b16 %v399
    %v439 = vunpack.c.l.b16 %v400
    %v440 = vunpack.c.l.b16 %v401
    %v441 = vunpack.c.l.b16 %v402
    %v442 = vunpack.c.l.b16 %v403
    %v443 = vunpack.c.l.b16 %v404
    %v444 = vpack.c.b16 %v429, %v428
    %v445 = vpack.c.b16 %v431, %v430
    %v446 = vpack.c.b16 %v433, %v432
    %v447 = vpack.c.b16 %v435, %v434
    %v448 = vpack.c.b16 %v437, %v436
    %v449 = vpack.c.b16 %v439, %v438
    %v450 = vpack.c.b16 %v441, %v440
    %v451 = vpack.c.b16 %v443, %v442
    %460 = vmatprep.subr.bf16.mxu0 0
    %461 = vmatpush1.bf16.msra.mxu0 %v451
    %462 = vmatprep.subr.bf16.mxu0 0
    %463 = vmatpush1.bf16.msra.mxu0 %v450
    %464 = vmatprep.subr.bf16.mxu0 0
    %465 = vmatpush1.bf16.msra.mxu0 %v449
    %466 = vmatprep.subr.bf16.mxu0 0
    %467 = vmatpush1.bf16.msra.mxu0 %v448
    %468 = vmatprep.subr.bf16.mxu0 0
    %469 = vmatpush1.bf16.msra.mxu0 %v447
    %470 = vmatprep.subr.bf16.mxu0 0
    %471 = vmatpush1.bf16.msra.mxu0 %v446
    %472 = vmatprep.subr.bf16.mxu0 0
    %473 = vmatpush1.bf16.msra.mxu0 %v445
    %474 = vmatprep.subr.bf16.mxu0 0
    %475 = vmatpush1.bf16.msra.mxu0 %v444
    %476 = vmatprep.subr.bf16.mxu0 0
    %477 = vmatpush2.bf16.msra.mxu0 0
    %478 = vmatprep.subr.bf16.mxu0 0
    %479 = vmatpush2.bf16.msra.mxu0 0
    %480 = vmatprep.subr.bf16.mxu0 0
    %481 = vmatpush2.bf16.msra.mxu0 0
    %482 = vmatprep.subr.bf16.mxu0 0
    %483 = vmatpush2.bf16.msra.mxu0 0
    %484 = vmatprep.subr.bf16.mxu0 0
    %485 = vmatpush2.bf16.msra.mxu0 0
    %486 = vmatprep.subr.bf16.mxu0 0
    %487 = vmatpush2.bf16.msra.mxu0 0
    %488 = vmatprep.subr.bf16.mxu0 0
    %489 = vmatpush2.bf16.msra.mxu0 0
    %490 = vmatprep.subr.bf16.mxu0 0
    %491 = vmatpush2.bf16.msra.mxu0 0
    %492 = vmatprep.mubr.bf16.mxu0 0
    %493 = vmatmul.mubr.bf16.gmra.mxu0 %v388
    %v494 = vpop.f32.mrf.mxu0
    %v495 = vadd.f32 %v410, %v494
    %v496 = vpop.f32.mrf.mxu0
    %v497 = vpop.f32.mrf.mxu0
    %v498 = vpop.f32.mrf.mxu0
    %499 = vdwg.mxu0
    %v500 = vmax.f32 %v495, 0.0
    %v501 = vpack.c.bf16 %v500, %v500
    %v502 = vld [vmem:[#allocation11] sm:$0xf]
    %v503 = vld [vmem:[#allocation11 + $0x4] sm:$0xf]
    %v504 = vld [vmem:[#allocation11 + $0x8] sm:$0xf]
    %v505 = vld [vmem:[#allocation11 + $0xc] sm:$0xf]
    %v506 = vld [vmem:[#allocation11 + $0x10] sm:$0xf]
    %v507 = vld [vmem:[#allocation11 + $0x14] sm:$0xf]
    %v508 = vld [vmem:[#allocation11 + $0x18] sm:$0xf]
    %v509 = vld [vmem:[#allocation11 + $0x1c] sm:$0xf]
    %v510 = vld [vmem:[#allocation11 + $0x20] sm:$0xf]
    %v511 = vld [vmem:[#allocation11 + $0x24] sm:$0xf]
    %v512 = vld [vmem:[#allocation11 + $0x28] sm:$0xf]
    %v513 = vld [vmem:[#allocation11 + $0x2c] sm:$0xf]
    %v514 = vld [vmem:[#allocation11 + $0x30] sm:$0xf]
    %v515 = vld [vmem:[#allocation11 + $0x34] sm:$0xf]
    %v516 = vld [vmem:[#allocation11 + $0x38] sm:$0xf]
    %v517 = vld [vmem:[#allocation11 + $0x3c] sm:$0xf]
    %v518 = vld [vmem:[%s9] sm:$0x1]
    %v520 = vlaneseq
    %v521 = vshrl.u32 %v520, 7
    %v522 = vsub.s32 0, %v521
    %v523 = vrot.slane %v518, %v522
    %v541 = vunpack.c.l.b16 %v502
    %v542 = vunpack.c.l.b16 %v503
    %v543 = vunpack.c.l.b16 %v504
    %v544 = vunpack.c.l.b16 %v505
    %v545 = vunpack.c.l.b16 %v506
    %v546 = vunpack.c.l.b16 %v507
    %v547 = vunpack.c.l.b16 %v508
    %v548 = vunpack.c.l.b16 %v509
    %v549 = vunpack.c.l.b16 %v510
    %v550 = vunpack.c.l.b16 %v511
    %v551 = vunpack.c.l.b16 %v512
    %v552 = vunpack.c.l.b16 %v513
    %v553 = vunpack.c.l.b16 %v514
    %v554 = vunpack.c.l.b16 %v515
    %v555 = vunpack.c.l.b16 %v516
    %v556 = vunpack.c.l.b16 %v517
    %v557 = vpack.c.b16 %v542, %v541
    %v558 = vpack.c.b16 %v544, %v543
    %v559 = vpack.c.b16 %v546, %v545
    %v560 = vpack.c.b16 %v548, %v547
    %v561 = vpack.c.b16 %v550, %v549
    %v562 = vpack.c.b16 %v552, %v551
    %v563 = vpack.c.b16 %v554, %v553
    %v564 = vpack.c.b16 %v556, %v555
    %573 = vmatprep.subr.bf16.mxu0 0
    %574 = vmatpush1.bf16.msra.mxu0 %v564
    %575 = vmatprep.subr.bf16.mxu0 0
    %576 = vmatpush1.bf16.msra.mxu0 %v563
    %577 = vmatprep.subr.bf16.mxu0 0
    %578 = vmatpush1.bf16.msra.mxu0 %v562
    %579 = vmatprep.subr.bf16.mxu0 0
    %580 = vmatpush1.bf16.msra.mxu0 %v561
    %581 = vmatprep.subr.bf16.mxu0 0
    %582 = vmatpush1.bf16.msra.mxu0 %v560
    %583 = vmatprep.subr.bf16.mxu0 0
    %584 = vmatpush1.bf16.msra.mxu0 %v559
    %585 = vmatprep.subr.bf16.mxu0 0
    %586 = vmatpush1.bf16.msra.mxu0 %v558
    %587 = vmatprep.subr.bf16.mxu0 0
    %588 = vmatpush1.bf16.msra.mxu0 %v557
    %589 = vmatprep.subr.bf16.mxu0 0
    %590 = vmatpush2.bf16.msra.mxu0 0
    %591 = vmatprep.subr.bf16.mxu0 0
    %592 = vmatpush2.bf16.msra.mxu0 0
    %593 = vmatprep.subr.bf16.mxu0 0
    %594 = vmatpush2.bf16.msra.mxu0 0
    %595 = vmatprep.subr.bf16.mxu0 0
    %596 = vmatpush2.bf16.msra.mxu0 0
    %597 = vmatprep.subr.bf16.mxu0 0
    %598 = vmatpush2.bf16.msra.mxu0 0
    %599 = vmatprep.subr.bf16.mxu0 0
    %600 = vmatpush2.bf16.msra.mxu0 0
    %601 = vmatprep.subr.bf16.mxu0 0
    %602 = vmatpush2.bf16.msra.mxu0 0
    %603 = vmatprep.subr.bf16.mxu0 0
    %604 = vmatpush2.bf16.msra.mxu0 0
    %605 = vmatprep.mubr.bf16.mxu0 0
    %606 = vmatmul.mubr.bf16.gmra.mxu0 %v501
    %v607 = vpop.f32.mrf.mxu0
    %v608 = vadd.f32 %v523, %v607
    %v609 = vpop.f32.mrf.mxu0
    %v610 = vpop.f32.mrf.mxu0
    %v611 = vpop.f32.mrf.mxu0
    %612 = vdwg.mxu0
    %v613 = vlaneseq
    %v614 = vand.u32 %v613, 127
    %vm615 = vcmp.lt.s32.totalorder %v614, 64
    %v616 = vsel %vm615, %v608, -1e+30
    %617 = vmax.xlane.f32.xlu0 %v616
    %v618 = vpop.xlane.xlu0 %617
    %v619 = vsub.f32 %v616, %v618
    %v620 = vmul.f32 %v619, 1.442695
    %v621 = vpow.pop %v620
    %622 = vadd.xlane.f32.xlu0 %v621
    %v623 = vpop.xlane.xlu0 %622
    %v624 = vlog2.pop %v623
    %v625 = vmul.f32 %v624, 0.6931472
    %v626 = vsub.f32 %v619, %v625
    %627 = vst [vmem:[#allocation13] sm:$0xff] %v626
    %628 = vst [vmem:[#allocation14] sm:$0xff] %v377
    %629 = vst [vmem:[#allocation14 + $0x8] sm:$0xff] %v379
    // Predicated region
    $region66: #{tpu_custom_call.1} parent=1 // pred_check
      _
    $region67: #{tpu_custom_call.1} parent=1 // pred_check_branch
      %631 = sbr.rel (0) target = $region69
    $region68: #{tpu_custom_call.1} parent=1 // pred_region
      %s633 = ssub.s32 128, 128
      %634 = vsyncadd [#allocation4], %s633
      %s636 = sshll.u32 [#allocation13], 4
      %s637 = int_to_ptr.vmem [resolvable:$true] %s636
      %639 = dma.vmem_to_hbm [thread:$0]  %s637, 128, %s10, [#allocation4]
    $region69: #{tpu_custom_call.1} parent=1 // pred_fallthru
      _
    // Predicated region
    $region70: #{tpu_custom_call.1} parent=1 // pred_check
      _
    $region71: #{tpu_custom_call.1} parent=1 // pred_check_branch
      %641 = sbr.rel (0) target = $region73
    $region72: #{tpu_custom_call.1} parent=1 // pred_region
      %s643 = ssub.s32 256, 256
      %644 = vsyncadd [#allocation15], %s643
      %s646 = sshll.u32 [#allocation14], 4
      %s647 = int_to_ptr.vmem [resolvable:$true] %s646
      %649 = dma.vmem_to_hbm [thread:$0]  %s647, 256, %s11, [#allocation15]
    $region73: #{tpu_custom_call.1} parent=1 // pred_fallthru
      _
    // Predicated region
    $region74: #{tpu_custom_call.1} parent=1 // pred_check
      _
    $region75: #{tpu_custom_call.1} parent=1 // pred_check_branch
      %651 = sbr.rel (0) target = $region77
    $region76: #{tpu_custom_call.1} parent=1 // pred_region
      %652 = dma.done [#allocation4], 128
    $region77: #{tpu_custom_call.1} parent=1 // pred_fallthru
      _
    // Predicated region
    $region78: #{tpu_custom_call.1} parent=1 // pred_check
      _
    $region79: #{tpu_custom_call.1} parent=1 // pred_check_branch
      %654 = sbr.rel (0) target = $region81
    $region80: #{tpu_custom_call.1} parent=1 // pred_region
      %655 = dma.done [#allocation15], 256
    $region81: #{tpu_custom_call.1} parent=1 // pred_fallthru
      _
    %656 = vsyncpa [#allocation3], 1
    %657 = vsyncpa [#allocation6], 1
    %658 = vsyncpa [#allocation9], 1
    %659 = vsyncpa [#allocation12], 1
    %660 = vsyncpa [#allocation4], 1
    %661 = vsyncpa [#allocation15], 1

</llo_original>
